<compile_context>
chip_gen: v7x
topology: tpu7x:2x2x1
jax: 0.10.0
libtpu: 0.0.40
codegen_flags: <defaults>
</compile_context>

<pallas_src>
import jax
import jax.numpy as jnp
import numpy as np
from jax.experimental import pallas as pl
from jax.experimental.pallas import tpu as pltpu

LN_EPS = 1e-5  # torch.nn.LayerNorm default


def _round_up(n, m):
    return ((n + m - 1) // m) * m


def _mln_kernel(x_ref, c_ref, wr_ref, br_ref, wgb_ref, bgb_ref, o_ref):
    F = x_ref.shape[-1]

    # ---- LayerNorm(x) over the feature (lane) axis, biased variance, f32 stats ----
    x = x_ref[...].astype(jnp.float32)
    mu = jnp.mean(x, axis=-1, keepdims=True)
    xc = x - mu
    var = jnp.mean(xc * xc, axis=-1, keepdims=True)
    x_n = xc * jax.lax.rsqrt(var + LN_EPS)

    # ---- reduce: h = ReLU(c @ W_r + b_r)  (MXU, f32 accumulation) ----
    h = jnp.dot(c_ref[...], wr_ref[...], preferred_element_type=jnp.float32)
    h = jnp.maximum(h + br_ref[...].astype(jnp.float32), 0.0)

    # ---- fused gamma/beta heads: one [tile_b, 2F] matmul ----
    gb = jnp.dot(h.astype(wgb_ref.dtype), wgb_ref[...],
                 preferred_element_type=jnp.float32)
    gb = gb + bgb_ref[...].astype(jnp.float32)
    gamma = gb[:, :F]
    beta = gb[:, F:]

    # ---- modulation ----
    o_ref[...] = (gamma * x_n + beta).astype(o_ref.dtype)


def _choose_tile_b(B, itemsize, F, C):
    """Row tile: as large as a ~40 MiB VMEM budget allows, capped at 4096 rows."""
    # Sub-32-bit storage packs 16 / 32 rows per sublane tile.
    sub = {1: 32, 2: 16}.get(itemsize, 8)
    # Per-row VMEM: double-buffered x/c/out tiles (storage dtype) + f32
    # temporaries (x, xc, x_n, h, modulation chain ~ 8F) + the [*, 2F] f32 gb.
    per_row = 2 * (2 * F + C) * itemsize + (8 * F + 2 * F) * 4
    budget = 40 * 1024 * 1024
    max_tile = max(sub, (budget // per_row) // sub * sub)
    tile_b = min(4096, max_tile)
    if B <= tile_b:
        if B >= 1024:
            # Two grid steps so both v7x TensorCores get >= 512-row tiles.
            # TODO(synk): gate on pltpu.get_tpu_info() core count; harmless on 1-TC chips.
            tile_b = _round_up(pl.cdiv(B, 2), sub)
        else:
            tile_b = _round_up(B, sub)
    return tile_b


@jax.jit
def mln_forward(x, c, w_r, b_r, w_g, b_g, w_b, b_b):
    """x: [B, F], c: [B, C]; weights stored [in, out], biases [1, out]."""
    B, F = x.shape
    _, C = c.shape

    # Fuse gamma/beta into one matmul: W_gb [F, 2F], b_gb [1, 2F].
    w_gb = jnp.concatenate([w_g, w_b], axis=1)
    b_gb = jnp.concatenate([b_g, b_b], axis=1)

    tile_b = _choose_tile_b(B, x.dtype.itemsize, F, C)
    # Ragged last tile handled by Pallas: partial block, masked store (garbage
    # tail rows never reach HBM; each row is independent) -> no jnp.pad copies.
    grid_b = pl.cdiv(B, tile_b)

    row_x = pl.BlockSpec((tile_b, F), lambda i: (i, 0))
    row_c = pl.BlockSpec((tile_b, C), lambda i: (i, 0))
    # Constant index_map -> weights/biases resident across grid steps.
    # NOTE: at F=128 their footprint is a few hundred KiB; for F >~ 1-2K, tile
    # the 2F output columns (and single-buffer via pipeline_mode=pl.Buffered(1))
    # so the resident copy does not blow v7x's 64 MiB per-core VMEM.
    const = lambda shape: pl.BlockSpec(shape, lambda i: (0, 0))

    # VMEM budget: double-buffered row tiles + (double-buffered) weights + f32
    # temporaries, capped at 48 MiB to leave headroom under v7x's 64 MiB.
    tile_bytes = 2 * tile_b * (2 * F + C) * x.dtype.itemsize
    w_bytes = 2 * (w_r.size + b_r.size + w_gb.size + b_gb.size) * w_r.dtype.itemsize
    tmp_bytes = tile_b * (8 * F + 2 * F) * 4
    vmem_limit = int(min(48 * 1024 * 1024,
                         max(int(1.5 * (tile_bytes + w_bytes + tmp_bytes)),
                             16 * 1024 * 1024)))

    flops = 2 * B * (C * F + F * 2 * F) + 10 * B * F
    bytes_accessed = (B * F * x.dtype.itemsize                 # x in
                      + B * F * x.dtype.itemsize               # out writeback
                      + B * C * c.dtype.itemsize               # c in
                      + (w_r.size + b_r.size + w_gb.size + b_gb.size)
                      * w_r.dtype.itemsize)                    # one resident copy

    return pl.pallas_call(
        _mln_kernel,
        out_shape=jax.ShapeDtypeStruct((B, F), x.dtype),
        grid_spec=pl.GridSpec(
            grid=(grid_b,),
            in_specs=[
                row_x,                 # x               [B, F]
                row_c,                 # c               [B, C]
                const(w_r.shape),      # W_reduce        [C, F]
                const(b_r.shape),      # b_reduce        [1, F]
                const(w_gb.shape),     # W_gamma||W_beta [F, 2F]
                const(b_gb.shape),     # b_gamma||b_beta [1, 2F]
            ],
            out_specs=row_x,
        ),
        compiler_params=pltpu.CompilerParams(
            dimension_semantics=("parallel",),
            vmem_limit_bytes=vmem_limit),
        cost_estimate=pl.CostEstimate(
            flops=flops, transcendentals=B, bytes_accessed=bytes_accessed),
    )(x, c, w_r, b_r, w_gb, b_gb)


def mln_reference(x, c, w_r, b_r, w_g, b_g, w_b, b_b):
    mu = jnp.mean(x, axis=-1, keepdims=True)
    var = jnp.mean((x - mu) ** 2, axis=-1, keepdims=True)
    x_n = (x - mu) / jnp.sqrt(var + LN_EPS)
    h = jnp.maximum(0.0, c @ w_r + b_r)
    gamma = h @ w_g + b_g
    beta = h @ w_b + b_b
    return gamma * x_n + beta


if __name__ == "__main__":
    # Small shapes consistent with the module: MLN(c_dim=32, f_dim=128).
    B, C_DIM, F_DIM = 24, 32, 128

    key = jax.random.PRNGKey(0)
    ks = jax.random.split(key, 8)

    x = jax.random.normal(ks[0], (B, F_DIM), jnp.float32)
    c = jax.random.normal(ks[1], (B, C_DIM), jnp.float32)

    def uinit(k, shape, fan_in):
        bound = 1.0 / np.sqrt(fan_in)
        return jax.random.uniform(k, shape, jnp.float32, -bound, bound)

    # Weights stored pre-transposed [in, out]; biases [1, out].
    # NOTE: the module's reset_parameters() zeroes the gamma/beta weights; we use
    # small random values so the full compute path is exercised, but keep the
    # module's bias init (gamma.bias = 1, beta.bias = 0).
    w_r = uinit(ks[2], (C_DIM, F_DIM), C_DIM)
    b_r = uinit(ks[3], (1, F_DIM), C_DIM)
    w_g = uinit(ks[4], (F_DIM, F_DIM), F_DIM)
    b_g = jnp.ones((1, F_DIM), jnp.float32)
    w_b = uinit(ks[5], (F_DIM, F_DIM), F_DIM)
    b_b = jnp.zeros((1, F_DIM), jnp.float32)

    out = mln_forward(x, c, w_r, b_r, w_g, b_g, w_b, b_b)
    out = jax.block_until_ready(out)

    ref = mln_reference(x, c, w_r, b_r, w_g, b_g, w_b, b_b)
    np.testing.assert_allclose(np.asarray(out), np.asarray(ref),
                               rtol=1e-5, atol=1e-5)
    print("KERNEL_OK")
</pallas_src>

<mosaic_0001>
module attributes {stable_mosaic.version = 11 : i64} {
  func.func @_mln_kernel(%arg0: i32, %arg1: memref<24x128xf32, #tpu.memory_space<vmem>>, %arg2: memref<24x32xf32, #tpu.memory_space<vmem>>, %arg3: memref<32x128xf32, #tpu.memory_space<vmem>>, %arg4: memref<1x128xf32, #tpu.memory_space<vmem>>, %arg5: memref<128x256xf32, #tpu.memory_space<vmem>>, %arg6: memref<1x256xf32, #tpu.memory_space<vmem>>, %arg7: memref<24x128xf32, #tpu.memory_space<vmem>>) attributes {dimension_semantics = [#tpu.dimension_semantics<parallel>], iteration_bounds = array<i64: 1>, scalar_prefetch = 0 : i64, scratch_operands = 0 : i64, tpu.core_type = #tpu.core_type<tc>, window_params = [{transform_indices = @transform_0, window_bounds = array<i64: 24, 128>}, {transform_indices = @transform_1, window_bounds = array<i64: 24, 32>}, {pipeline_mode = #tpu.pipeline_mode<synchronous>, transform_indices = @transform_2, window_bounds = array<i64: 32, 128>}, {pipeline_mode = #tpu.pipeline_mode<synchronous>, transform_indices = @transform_3, window_bounds = array<i64: 1, 128>}, {pipeline_mode = #tpu.pipeline_mode<synchronous>, transform_indices = @transform_4, window_bounds = array<i64: 128, 256>}, {pipeline_mode = #tpu.pipeline_mode<synchronous>, transform_indices = @transform_5, window_bounds = array<i64: 1, 256>}, {transform_indices = @transform_6, window_bounds = array<i64: 24, 128>}]} {
    %c0 = arith.constant 0 : index
    %c0_0 = arith.constant 0 : index
    %0 = vector.load %arg1[%c0, %c0_0] : memref<24x128xf32, #tpu.memory_space<vmem>>, vector<24x128xf32>
    %cst = arith.constant dense<0.000000e+00> : vector<24xf32>
    %1 = vector.multi_reduction <add>, %0, %cst [1] : vector<24x128xf32> to vector<24xf32>
    %2 = vector.shape_cast %1 : vector<24xf32> to vector<24x1xf32>
    %cst_1 = arith.constant 1.280000e+02 : f32
    %3 = vector.broadcast %cst_1 : f32 to vector<24x1xf32>
    %4 = arith.divf %2, %3 : vector<24x1xf32>
    %5 = vector.broadcast %4 : vector<24x1xf32> to vector<24x128xf32>
    %6 = arith.subf %0, %5 : vector<24x128xf32>
    %7 = arith.mulf %6, %6 : vector<24x128xf32>
    %cst_2 = arith.constant dense<0.000000e+00> : vector<24xf32>
    %8 = vector.multi_reduction <add>, %7, %cst_2 [1] : vector<24x128xf32> to vector<24xf32>
    %9 = vector.shape_cast %8 : vector<24xf32> to vector<24x1xf32>
    %cst_3 = arith.constant 1.280000e+02 : f32
    %10 = vector.broadcast %cst_3 : f32 to vector<24x1xf32>
    %11 = arith.divf %9, %10 : vector<24x1xf32>
    %cst_4 = arith.constant 9.99999974E-6 : f32
    %12 = vector.broadcast %cst_4 : f32 to vector<24x1xf32>
    %13 = arith.addf %11, %12 : vector<24x1xf32>
    %14 = math.rsqrt %13 : vector<24x1xf32>
    %15 = vector.broadcast %14 : vector<24x1xf32> to vector<24x128xf32>
    %16 = arith.mulf %6, %15 : vector<24x128xf32>
    %c0_5 = arith.constant 0 : index
    %c0_6 = arith.constant 0 : index
    %17 = vector.load %arg2[%c0_5, %c0_6] : memref<24x32xf32, #tpu.memory_space<vmem>>, vector<24x32xf32>
    %c0_7 = arith.constant 0 : index
    %c0_8 = arith.constant 0 : index
    %18 = vector.load %arg3[%c0_7, %c0_8] : memref<32x128xf32, #tpu.memory_space<vmem>>, vector<32x128xf32>
    %cst_9 = arith.constant dense<0.000000e+00> : vector<24x128xf32>
    %19 = tpu.matmul %17, %18, %cst_9 {dimension_numbers = #tpu.dot_dimension_numbers<[1], [0], [0], [1], [0, 0, 1, 1], [], []>} : vector<24x32xf32>, vector<32x128xf32>, vector<24x128xf32> -> vector<24x128xf32>
    %c0_10 = arith.constant 0 : index
    %c0_11 = arith.constant 0 : index
    %20 = vector.load %arg4[%c0_10, %c0_11] : memref<1x128xf32, #tpu.memory_space<vmem>>, vector<1x128xf32>
    %21 = vector.broadcast %20 : vector<1x128xf32> to vector<24x128xf32>
    %22 = arith.addf %19, %21 : vector<24x128xf32>
    %cst_12 = arith.constant 0.000000e+00 : f32
    %23 = vector.broadcast %cst_12 : f32 to vector<24x128xf32>
    %24 = arith.maximumf %22, %23 : vector<24x128xf32>
    %c0_13 = arith.constant 0 : index
    %c0_14 = arith.constant 0 : index
    %25 = vector.load %arg5[%c0_13, %c0_14] : memref<128x256xf32, #tpu.memory_space<vmem>>, vector<128x256xf32>
    %cst_15 = arith.constant dense<0.000000e+00> : vector<24x256xf32>
    %26 = tpu.matmul %24, %25, %cst_15 {dimension_numbers = #tpu.dot_dimension_numbers<[1], [0], [0], [1], [0, 0, 1, 1], [], []>} : vector<24x128xf32>, vector<128x256xf32>, vector<24x256xf32> -> vector<24x256xf32>
    %c0_16 = arith.constant 0 : index
    %c0_17 = arith.constant 0 : index
    %27 = vector.load %arg6[%c0_16, %c0_17] : memref<1x256xf32, #tpu.memory_space<vmem>>, vector<1x256xf32>
    %28 = vector.broadcast %27 : vector<1x256xf32> to vector<24x256xf32>
    %29 = arith.addf %26, %28 : vector<24x256xf32>
    %30 = vector.extract_strided_slice %29 {offsets = [0, 0], sizes = [24, 128], strides = [1, 1]} : vector<24x256xf32> to vector<24x128xf32>
    %31 = vector.extract_strided_slice %29 {offsets = [0, 128], sizes = [24, 128], strides = [1, 1]} : vector<24x256xf32> to vector<24x128xf32>
    %32 = arith.mulf %30, %16 : vector<24x128xf32>
    %33 = arith.addf %32, %31 : vector<24x128xf32>
    %c0_18 = arith.constant 0 : index
    %c0_19 = arith.constant 0 : index
    %34 = vector.load %arg7[%c0_18, %c0_19] : memref<24x128xf32, #tpu.memory_space<vmem>>, vector<24x128xf32>
    tpu.vector_store %arg7[%c0_18, %c0_19], %33 {strides = array<i32>} : memref<24x128xf32, #tpu.memory_space<vmem>>, vector<24x128xf32>,
    return
  }
  func.func @transform_0(%arg0: i32) -> (i32, i32) {
    %c0_i32 = arith.constant 0 : i32
    %c0_i32_0 = arith.constant 0 : i32
    return %arg0, %c0_i32 : i32, i32
  }
  func.func @transform_1(%arg0: i32) -> (i32, i32) {
    %c0_i32 = arith.constant 0 : i32
    %c0_i32_0 = arith.constant 0 : i32
    return %arg0, %c0_i32 : i32, i32
  }
  func.func @transform_2(%arg0: i32) -> (i32, i32) {
    %c0_i32 = arith.constant 0 : i32
    %c0_i32_0 = arith.constant 0 : i32
    %c0_i32_1 = arith.constant 0 : i32
    return %c0_i32, %c0_i32_0 : i32, i32
  }
  func.func @transform_3(%arg0: i32) -> (i32, i32) {
    %c0_i32 = arith.constant 0 : i32
    %c0_i32_0 = arith.constant 0 : i32
    %c0_i32_1 = arith.constant 0 : i32
    return %c0_i32, %c0_i32_0 : i32, i32
  }
  func.func @transform_4(%arg0: i32) -> (i32, i32) {
    %c0_i32 = arith.constant 0 : i32
    %c0_i32_0 = arith.constant 0 : i32
    %c0_i32_1 = arith.constant 0 : i32
    return %c0_i32, %c0_i32_0 : i32, i32
  }
  func.func @transform_5(%arg0: i32) -> (i32, i32) {
    %c0_i32 = arith.constant 0 : i32
    %c0_i32_0 = arith.constant 0 : i32
    %c0_i32_1 = arith.constant 0 : i32
    return %c0_i32, %c0_i32_0 : i32, i32
  }
  func.func @transform_6(%arg0: i32) -> (i32, i32) {
    %c0_i32 = arith.constant 0 : i32
    %c0_i32_0 = arith.constant 0 : i32
    return %arg0, %c0_i32 : i32, i32
  }
}

</mosaic_0001>

<llo_original>
// kernel: mln_forward.1
$region0: #{mln_forward.1}
  #allocation0 [shape = 'u32[]', space=smem, size = 0x4, offset = 0x4, fixed_abs, tag = 'smem constant byte address 0x4 - core index']
  #allocation1 [shape = 'u32[144,128]{1,0:T(1,128)}', space=vmem, size = 0x12000, scoped, tag = 'internal scratch']
  %s0 = inlined_call_operand.vmem [shape: f32[24,128], index: 0, kind: input, shape index: {}]
  %s1 = inlined_call_operand.vmem [shape: f32[24,32], index: 1, kind: input, shape index: {}]
  %s2 = inlined_call_operand.vmem [shape: f32[32,128], index: 2, kind: input, shape index: {}]
  %s3 = inlined_call_operand.vmem [shape: f32[1,128], index: 3, kind: input, shape index: {}]
  %s4 = inlined_call_operand.vmem [shape: f32[128,256], index: 4, kind: input, shape index: {}]
  %s5 = inlined_call_operand.vmem [shape: f32[1,256], index: 5, kind: input, shape index: {}]
  %s6 = inlined_call_operand.hbm [shape: f32[24,128], index: 6, kind: output, shape index: {}]
  %s7 = sld [smem:[#allocation0]]
  $region34: #{mln_forward.1} parent=0
    _
  %s9 = ssub.s32 1, %s7
  %s10 = scalar_select 0, %s9, %s7
  $region1: #{mln_forward.1} parent=0
    #allocation2 [shape = 'u8[12288]{0}', space=vmem, size = 0x3000, scoped, tag = 'output window, operand 0, single buffered']
    #allocation3 [shape = 's32[1]{0}', space=sflag, size = 0x4, scoped, tag = 'scoped memory for mln_forward.1']
    %11 = vsyncpa [#allocation3], 0
    // Predicated region
    $region2: #{mln_forward.1} parent=1 // pred_check
      _
    $region3: #{mln_forward.1} parent=1 // pred_check_branch
      %13 = sbr.rel (0) target = $region5
    $region4: #{mln_forward.1} parent=1 // pred_region
      _
    $region5: #{mln_forward.1} parent=1 // pred_fallthru
      _
    // Predicated region
    $region6: #{mln_forward.1} parent=1 // pred_check
      _
    $region7: #{mln_forward.1} parent=1 // pred_check_branch
      %15 = sbr.rel (0) target = $region9
    $region8: #{mln_forward.1} parent=1 // pred_region
      _
    $region9: #{mln_forward.1} parent=1 // pred_fallthru
      _
    // Predicated region
    $region10: #{mln_forward.1} parent=1 // pred_check
      _
    $region11: #{mln_forward.1} parent=1 // pred_check_branch
      %17 = sbr.rel (0) target = $region13
    $region12: #{mln_forward.1} parent=1 // pred_region
      _
    $region13: #{mln_forward.1} parent=1 // pred_fallthru
      _
    // Predicated region
    $region14: #{mln_forward.1} parent=1 // pred_check
      _
    $region15: #{mln_forward.1} parent=1 // pred_check_branch
      %19 = sbr.rel (0) target = $region17
    $region16: #{mln_forward.1} parent=1 // pred_region
      _
    $region17: #{mln_forward.1} parent=1 // pred_fallthru
      _
    // Predicated region
    $region18: #{mln_forward.1} parent=1 // pred_check
      _
    $region19: #{mln_forward.1} parent=1 // pred_check_branch
      %21 = sbr.rel (0) target = $region21
    $region20: #{mln_forward.1} parent=1 // pred_region
      _
    $region21: #{mln_forward.1} parent=1 // pred_fallthru
      _
    // Predicated region
    $region22: #{mln_forward.1} parent=1 // pred_check
      _
    $region23: #{mln_forward.1} parent=1 // pred_check_branch
      %23 = sbr.rel (0) target = $region25
    $region24: #{mln_forward.1} parent=1 // pred_region
      _
    $region25: #{mln_forward.1} parent=1 // pred_fallthru
      _
    %v24 = vld [vmem:[%s0] sm:$0xff]
    %v25 = vld [vmem:[%s0 + $0x8] sm:$0xff]
    %v26 = vld [vmem:[%s0 + $0x10] sm:$0xff]
    %27 = vadd.xlane.f32.xlu0 %v24
    %v28 = vpop.xlane.xlu0 %27
    %29 = vadd.xlane.f32.xlu0 %v25
    %v30 = vpop.xlane.xlu0 %29
    %31 = vadd.xlane.f32.xlu0 %v26
    %v32 = vpop.xlane.xlu0 %31
    %v33 = vrcp.pop 128.0
    %v34 = vmul.f32 %v28, %v33
    %v35 = vmul.f32 %v30, %v33
    %v36 = vmul.f32 %v32, %v33
    %v37 = vsub.f32 %v24, %v34
    %v38 = vsub.f32 %v25, %v35
    %v39 = vsub.f32 %v26, %v36
    %v40 = vmul.f32 %v37, %v37
    %v41 = vmul.f32 %v38, %v38
    %v42 = vmul.f32 %v39, %v39
    %43 = vadd.xlane.f32.xlu0 %v40
    %v44 = vpop.xlane.xlu0 %43
    %45 = vadd.xlane.f32.xlu0 %v41
    %v46 = vpop.xlane.xlu0 %45
    %47 = vadd.xlane.f32.xlu0 %v42
    %v48 = vpop.xlane.xlu0 %47
    %v49 = vmul.f32 %v44, %v33
    %v50 = vmul.f32 %v46, %v33
    %v51 = vmul.f32 %v48, %v33
    %v52 = vadd.f32 %v49, 1e-05
    %v53 = vadd.f32 %v50, 1e-05
    %v54 = vadd.f32 %v51, 1e-05
    %v55 = vrsqrt.pop %v52
    %v56 = vrsqrt.pop %v53
    %v57 = vrsqrt.pop %v54
    %v58 = vmul.f32 %v37, %v55
    %v59 = vmul.f32 %v38, %v56
    %v60 = vmul.f32 %v39, %v57
    %v61 = vld [vmem:[%s1] sm:$0xff]
    %v62 = vld [vmem:[%s1 + $0x8] sm:$0xff]
    %v63 = vld [vmem:[%s1 + $0x10] sm:$0xff]
    %v64 = vld [vmem:[%s2] sm:$0xff]
    %v65 = vld [vmem:[%s2 + $0x8] sm:$0xff]
    %v66 = vld [vmem:[%s2 + $0x10] sm:$0xff]
    %v67 = vld [vmem:[%s2 + $0x18] sm:$0xff]
    %v68 = vld [vmem:[%s3] sm:$0x1]
    %v70 = vlaneseq
    %v71 = vshrl.u32 %v70, 7
    %v72 = vsub.s32 0, %v71
    %v73 = vrot.slane %v68, %v72
    %vm75 = vcmask 261120
    %v77 = vsel %vm75, %v61, 0
    %v80 = vsel %vm75, %v62, 0
    %v83 = vsel %vm75, %v63, 0
    %85 = vmatprep.subr.mxu0 0.0
    %86 = vmatpush1.msra.mxu0 %v64
    %87 = vmatprep.subr.mxu0 0.0
    %88 = vmatpush1.msra.mxu0 %v65
    %89 = vmatprep.subr.mxu0 0.0
    %90 = vmatpush1.msra.mxu0 %v66
    %91 = vmatprep.subr.mxu0 0.0
    %92 = vmatpush1.msra.mxu0 %v67
    %93 = vmatprep.subr.mxu0 0.0
    %94 = vmatpush1.msra.mxu0 0.0
    %95 = vmatprep.subr.mxu0 0.0
    %96 = vmatpush1.msra.mxu0 0.0
    %97 = vmatprep.subr.mxu0 0.0
    %98 = vmatpush1.msra.mxu0 0.0
    %99 = vmatprep.subr.mxu0 0.0
    %100 = vmatpush1.msra.mxu0 0.0
    %101 = vmatprep.subr.mxu0 0.0
    %102 = vmatpush1.msra.mxu0 0.0
    %103 = vmatprep.subr.mxu0 0.0
    %104 = vmatpush1.msra.mxu0 0.0
    %105 = vmatprep.subr.mxu0 0.0
    %106 = vmatpush1.msra.mxu0 0.0
    %107 = vmatprep.subr.mxu0 0.0
    %108 = vmatpush1.msra.mxu0 0.0
    %109 = vmatprep.subr.mxu0 0.0
    %110 = vmatpush1.msra.mxu0 0.0
    %111 = vmatprep.subr.mxu0 0.0
    %112 = vmatpush1.msra.mxu0 0.0
    %113 = vmatprep.subr.mxu0 0.0
    %114 = vmatpush1.msra.mxu0 0.0
    %115 = vmatprep.subr.mxu0 0.0
    %116 = vmatpush1.msra.mxu0 0.0
    %117 = vmatprep.subr.mxu0 0.0
    %118 = vmatpush1.msra.mxu0 0.0
    %119 = vmatprep.subr.mxu0 0.0
    %120 = vmatpush1.msra.mxu0 0.0
    %121 = vmatprep.subr.mxu0 0.0
    %122 = vmatpush1.msra.mxu0 0.0
    %123 = vmatprep.subr.mxu0 0.0
    %124 = vmatpush1.msra.mxu0 0.0
    %125 = vmatprep.subr.mxu0 0.0
    %126 = vmatpush1.msra.mxu0 0.0
    %127 = vmatprep.subr.mxu0 0.0
    %128 = vmatpush1.msra.mxu0 0.0
    %129 = vmatprep.subr.mxu0 0.0
    %130 = vmatpush1.msra.mxu0 0.0
    %131 = vmatprep.subr.mxu0 0.0
    %132 = vmatpush1.msra.mxu0 0.0
    %133 = vmatprep.subr.mxu0 0.0
    %134 = vmatpush1.msra.mxu0 0.0
    %135 = vmatprep.subr.mxu0 0.0
    %136 = vmatpush1.msra.mxu0 0.0
    %137 = vmatprep.subr.mxu0 0.0
    %138 = vmatpush1.msra.mxu0 0.0
    %139 = vmatprep.subr.mxu0 0.0
    %140 = vmatpush1.msra.mxu0 0.0
    %141 = vmatprep.subr.mxu0 0.0
    %142 = vmatpush1.msra.mxu0 0.0
    %143 = vmatprep.subr.mxu0 0.0
    %144 = vmatpush1.msra.mxu0 0.0
    %145 = vmatprep.subr.mxu0 0.0
    %146 = vmatpush1.msra.mxu0 0.0
    %147 = vmatprep.subr.mxu0 0.0
    %148 = vmatpush1.msra.mxu0 0.0
    %149 = vmatprep.mubr.f32.mxu0 0.0
    %150 = vmatmul.mubr.f32.gmra.mrb[0].mxu0 %v77
    %v151 = vpop.f32.mrb[0].mxu0
    %v152 = vadd.f32 %v73, %v151
    %v153 = vpop.f32.mrb[0].mxu0
    %154 = vmatprep.mubr.f32.mxu0 0.0
    %155 = vmatmul.mubr.f32.gmra.mrb[0].mxu0 %v80
    %v156 = vpop.f32.mrb[0].mxu0
    %v157 = vadd.f32 %v73, %v156
    %v158 = vpop.f32.mrb[0].mxu0
    %159 = vmatprep.mubr.f32.mxu0 0.0
    %160 = vmatmul.mubr.f32.gmra.mrb[0].mxu0 %v83
    %v161 = vpop.f32.mrb[0].mxu0
    %v162 = vadd.f32 %v73, %v161
    %v163 = vpop.f32.mrb[0].mxu0
    %164 = vdwg.mxu0
    %v165 = vmax.f32 %v152, 0.0
    %v166 = vmax.f32 %v157, 0.0
    %v167 = vmax.f32 %v162, 0.0
    %v168 = vld [vmem:[%s4] sm:$0xff]
    %v169 = vld [vmem:[%s4 + $0x8] sm:$0xff]
    %v170 = vld [vmem:[%s4 + $0x10] sm:$0xff]
    %v171 = vld [vmem:[%s4 + $0x18] sm:$0xff]
    %v172 = vld [vmem:[%s4 + $0x20] sm:$0xff]
    %v173 = vld [vmem:[%s4 + $0x28] sm:$0xff]
    %v174 = vld [vmem:[%s4 + $0x30] sm:$0xff]
    %v175 = vld [vmem:[%s4 + $0x38] sm:$0xff]
    %v176 = vld [vmem:[%s4 + $0x40] sm:$0xff]
    %v177 = vld [vmem:[%s4 + $0x48] sm:$0xff]
    %v178 = vld [vmem:[%s4 + $0x50] sm:$0xff]
    %v179 = vld [vmem:[%s4 + $0x58] sm:$0xff]
    %v180 = vld [vmem:[%s4 + $0x60] sm:$0xff]
    %v181 = vld [vmem:[%s4 + $0x68] sm:$0xff]
    %v182 = vld [vmem:[%s4 + $0x70] sm:$0xff]
    %v183 = vld [vmem:[%s4 + $0x78] sm:$0xff]
    %v184 = vld [vmem:[%s4 + $0x80] sm:$0xff]
    %v185 = vld [vmem:[%s4 + $0x88] sm:$0xff]
    %v186 = vld [vmem:[%s4 + $0x90] sm:$0xff]
    %v187 = vld [vmem:[%s4 + $0x98] sm:$0xff]
    %v188 = vld [vmem:[%s4 + $0xa0] sm:$0xff]
    %v189 = vld [vmem:[%s4 + $0xa8] sm:$0xff]
    %v190 = vld [vmem:[%s4 + $0xb0] sm:$0xff]
    %v191 = vld [vmem:[%s4 + $0xb8] sm:$0xff]
    %v192 = vld [vmem:[%s4 + $0xc0] sm:$0xff]
    %v193 = vld [vmem:[%s4 + $0xc8] sm:$0xff]
    %v194 = vld [vmem:[%s4 + $0xd0] sm:$0xff]
    %v195 = vld [vmem:[%s4 + $0xd8] sm:$0xff]
    %v196 = vld [vmem:[%s4 + $0xe0] sm:$0xff]
    %v197 = vld [vmem:[%s4 + $0xe8] sm:$0xff]
    %v198 = vld [vmem:[%s4 + $0xf0] sm:$0xff]
    %v199 = vld [vmem:[%s4 + $0xf8] sm:$0xff]
    %v200 = vld [vmem:[%s5] sm:$0x3]
    %v202 = vlaneseq
    %v203 = vshrl.u32 %v202, 7
    %v204 = vsub.s32 0, %v203
    %v205 = vrot.slane %v200, %v204
    %v206 = vlaneseq
    %v207 = vshrl.u32 %v206, 7
    %v208 = vsub.s32 1, %v207
    %v209 = vrot.slane %v200, %v208
    %212 = vmatprep.subr.mxu0 %v169
    %213 = vmatpush1.msra.mxu0 %v168
    %214 = vmatprep.subr.mxu0 %v171
    %215 = vmatpush1.msra.mxu0 %v170
    %216 = vmatprep.subr.mxu0 %v173
    %217 = vmatpush1.msra.mxu0 %v172
    %218 = vmatprep.subr.mxu0 %v175
    %219 = vmatpush1.msra.mxu0 %v174
    %220 = vmatprep.subr.mxu0 %v177
    %221 = vmatpush1.msra.mxu0 %v176
    %222 = vmatprep.subr.mxu0 %v179
    %223 = vmatpush1.msra.mxu0 %v178
    %224 = vmatprep.subr.mxu0 %v181
    %225 = vmatpush1.msra.mxu0 %v180
    %226 = vmatprep.subr.mxu0 %v183
    %227 = vmatpush1.msra.mxu0 %v182
    %228 = vmatprep.subr.mxu0 %v185
    %229 = vmatpush1.msra.mxu0 %v184
    %230 = vmatprep.subr.mxu0 %v187
    %231 = vmatpush1.msra.mxu0 %v186
    %232 = vmatprep.subr.mxu0 %v189
    %233 = vmatpush1.msra.mxu0 %v188
    %234 = vmatprep.subr.mxu0 %v191
    %235 = vmatpush1.msra.mxu0 %v190
    %236 = vmatprep.subr.mxu0 %v193
    %237 = vmatpush1.msra.mxu0 %v192
    %238 = vmatprep.subr.mxu0 %v195
    %239 = vmatpush1.msra.mxu0 %v194
    %240 = vmatprep.subr.mxu0 %v197
    %241 = vmatpush1.msra.mxu0 %v196
    %242 = vmatprep.subr.mxu0 %v199
    %243 = vmatpush1.msra.mxu0 %v198
    %244 = vmatprep.subr.mxu0 0.0
    %245 = vmatpush1.msra.mxu0 0.0
    %246 = vmatprep.subr.mxu0 0.0
    %247 = vmatpush1.msra.mxu0 0.0
    %248 = vmatprep.subr.mxu0 0.0
    %249 = vmatpush1.msra.mxu0 0.0
    %250 = vmatprep.subr.mxu0 0.0
    %251 = vmatpush1.msra.mxu0 0.0
    %252 = vmatprep.subr.mxu0 0.0
    %253 = vmatpush1.msra.mxu0 0.0
    %254 = vmatprep.subr.mxu0 0.0
    %255 = vmatpush1.msra.mxu0 0.0
    %256 = vmatprep.subr.mxu0 0.0
    %257 = vmatpush1.msra.mxu0 0.0
    %258 = vmatprep.subr.mxu0 0.0
    %259 = vmatpush1.msra.mxu0 0.0
    %260 = vmatprep.subr.mxu0 0.0
    %261 = vmatpush1.msra.mxu0 0.0
    %262 = vmatprep.subr.mxu0 0.0
    %263 = vmatpush1.msra.mxu0 0.0
    %264 = vmatprep.subr.mxu0 0.0
    %265 = vmatpush1.msra.mxu0 0.0
    %266 = vmatprep.subr.mxu0 0.0
    %267 = vmatpush1.msra.mxu0 0.0
    %268 = vmatprep.subr.mxu0 0.0
    %269 = vmatpush1.msra.mxu0 0.0
    %270 = vmatprep.subr.mxu0 0.0
    %271 = vmatpush1.msra.mxu0 0.0
    %272 = vmatprep.subr.mxu0 0.0
    %273 = vmatpush1.msra.mxu0 0.0
    %274 = vmatprep.subr.mxu0 0.0
    %275 = vmatpush1.msra.mxu0 0.0
    %276 = vmatprep.mubr.f32.mxu0 0.0
    %277 = vmatmul.mubr.f32.gmra.mrb[0].mxu0 %v165
    %v278 = vpop.f32.mrb[0].mxu0
    %v279 = vadd.f32 %v205, %v278
    %v280 = vpop.f32.mrb[0].mxu0
    %v281 = vadd.f32 %v209, %v280
    %282 = vmatprep.mubr.f32.mxu0 0.0
    %283 = vmatmul.mubr.f32.gmra.mrb[0].mxu0 %v166
    %v284 = vpop.f32.mrb[0].mxu0
    %v285 = vadd.f32 %v205, %v284
    %v286 = vpop.f32.mrb[0].mxu0
    %v287 = vadd.f32 %v209, %v286
    %288 = vmatprep.mubr.f32.mxu0 0.0
    %289 = vmatmul.mubr.f32.gmra.mrb[0].mxu0 %v167
    %v290 = vpop.f32.mrb[0].mxu0
    %v291 = vadd.f32 %v205, %v290
    %v292 = vpop.f32.mrb[0].mxu0
    %v293 = vadd.f32 %v209, %v292
    %294 = vdwg.mxu0
    %v295 = vmul.f32 %v279, %v58
    %v296 = vmul.f32 %v285, %v59
    %v297 = vmul.f32 %v291, %v60
    %v298 = vadd.f32 %v295, %v281
    %v299 = vadd.f32 %v296, %v287
    %v300 = vadd.f32 %v297, %v293
    %301 = vst [vmem:[#allocation2] sm:$0xff] %v298
    %302 = vst [vmem:[#allocation2 + $0x8] sm:$0xff] %v299
    %303 = vst [vmem:[#allocation2 + $0x10] sm:$0xff] %v300
    // Predicated region
    $region26: #{mln_forward.1} parent=1 // pred_check
      _
    $region27: #{mln_forward.1} parent=1 // pred_check_branch
      %305 = sbr.rel (0) target = $region29
    $region28: #{mln_forward.1} parent=1 // pred_region
      %s307 = ssub.s32 384, 384
      %308 = vsyncadd [#allocation3], %s307
      %s309 = sshll.u32 [#allocation2], 4
      %s310 = int_to_ptr.vmem [resolvable:$true] %s309
      %315 = dma.vmem_to_hbm [thread:$0]  %s310, 384, %s6, [#allocation3], 128, 128, 8
    $region29: #{mln_forward.1} parent=1 // pred_fallthru
      _
    // Predicated region
    $region30: #{mln_forward.1} parent=1 // pred_check
      _
    $region31: #{mln_forward.1} parent=1 // pred_check_branch
      %317 = sbr.rel (0) target = $region33
    $region32: #{mln_forward.1} parent=1 // pred_region
      %318 = dma.done [#allocation3], 384
    $region33: #{mln_forward.1} parent=1 // pred_fallthru
      _
    %319 = vsyncpa [#allocation3], 1

</llo_original>
